<compile_context>
chip_gen: v6e
topology: v6e:2x2x1
jax: 0.10.0
libtpu: 0.0.40
codegen_flags: <defaults>
</compile_context>

<pallas_src>
import functools

import jax
import jax.numpy as jnp
from jax.experimental import pallas as pl
from jax.experimental.pallas import tpu as pltpu

HIDDEN = 50
HPAD = 128            # padded hidden width (lane-dense activations)
USE_BF16 = True       # bf16 matmul operands, f32 MXU accumulation
MAX_TB = 4096         # max batch-tile rows (fits v7x's 64 MiB VMEM with headroom)


def _round_up(v, m):
    return (v + m - 1) // m * m


# ----------------------------- kernel ---------------------------------------


def qfunction_kernel(x_ref, w1_ref, b1_ref, w2_ref, b2_ref, w3_ref, b3_ref, out_ref):
    """Fused 3-layer MLP on one (TB, obs) batch tile.

    x streams from HBM in f32 and is narrowed to the weight dtype here in VMEM.
    All matmuls accumulate in f32 on the MXU; bias add + ReLU stay in f32 on the
    VPU; activations are narrowed back to the weight dtype only for the next
    matmul's operands.  Output block is (TB, n_actions) f32 (narrow writeback).
    """
    x = x_ref[...].astype(w1_ref.dtype)                                   # (TB, obs)

    h1 = jnp.dot(x, w1_ref[...], preferred_element_type=jnp.float32)      # (TB, HPAD)
    h1 = jnp.maximum(h1 + b1_ref[...], 0.0).astype(w2_ref.dtype)

    h2 = jnp.dot(h1, w2_ref[...], preferred_element_type=jnp.float32)     # (TB, HPAD)
    h2 = jnp.maximum(h2 + b2_ref[...], 0.0).astype(w3_ref.dtype)

    q = jnp.dot(h2, w3_ref[...], preferred_element_type=jnp.float32)      # (TB, A)
    out_ref[...] = (q + b3_ref[...]).astype(out_ref.dtype)


# --------------------------- wrapper / plumbing ------------------------------


def prepare_params(params, obs_size, n_actions, hidden=HIDDEN, use_bf16=USE_BF16):
    """Zero-pad hidden dims to lane-dense 128 and cast matmul operands to bf16.
    Padded hidden columns/rows are exactly zero, so padded activation lanes stay
    zero through the whole net.  W3/b3 keep their natural n_actions width."""
    w1, b1, w2, b2, w3, b3 = params
    wdt = jnp.bfloat16 if use_bf16 else jnp.float32

    w1p = jnp.zeros((obs_size, HPAD), jnp.float32).at[:, :hidden].set(w1).astype(wdt)
    b1p = jnp.zeros((1, HPAD), jnp.float32).at[:, :hidden].set(b1)
    w2p = jnp.zeros((HPAD, HPAD), jnp.float32).at[:hidden, :hidden].set(w2).astype(wdt)
    b2p = jnp.zeros((1, HPAD), jnp.float32).at[:, :hidden].set(b2)
    w3p = jnp.zeros((HPAD, n_actions), jnp.float32).at[:hidden, :].set(w3).astype(wdt)
    b3p = jnp.asarray(b3, jnp.float32).reshape(1, n_actions)
    return (w1p, b1p, w2p, b2p, w3p, b3p)


def _choose_batch_tiling(batch, max_tb=MAX_TB):
    """Pick (tile_rows, padded_batch, n_steps).  Large batches get >=2 grid steps
    (so v7x can shard across its 2 TCs) with tiles <= max_tb; over-padding is at
    most n_steps*8 rows (never a full tile)."""
    b8 = _round_up(max(batch, 1), 8)
    if b8 <= 512:
        return b8, b8, 1                       # tiny batch: one tile, minimal padding
    n_steps = max(2, -(-b8 // max_tb))
    tb = _round_up(-(-b8 // n_steps), 8)
    return tb, tb * n_steps, n_steps


def _forward_impl(x, padded_params):
    """x: (B, H, W) f32.  Returns Q-values (B, n_actions) in float32."""
    w1p, b1p, w2p, b2p, w3p, b3p = padded_params
    n_actions = w3p.shape[1]
    B = x.shape[0]
    obs_size = x.shape[1] * x.shape[2]

    # rearrange 'b h w -> b (h w)'; keep f32 — the bf16 cast happens in-kernel.
    x2 = x.reshape(B, obs_size)

    tb, b_pad, n_steps = _choose_batch_tiling(B)
    if b_pad != B:
        x2 = jnp.pad(x2, ((0, b_pad - B), (0, 0)))

    q = pl.pallas_call(
        qfunction_kernel,
        out_shape=jax.ShapeDtypeStruct((b_pad, n_actions), jnp.float32),
        grid_spec=pltpu.PrefetchScalarGridSpec(
            num_scalar_prefetch=0,
            grid=(n_steps,),
            in_specs=[
                pl.BlockSpec((tb, obs_size), lambda i: (i, 0)),       # x tile streams
                pl.BlockSpec((obs_size, HPAD), lambda i: (0, 0)),      # W1 resident
                pl.BlockSpec((1, HPAD), lambda i: (0, 0)),             # b1 resident
                pl.BlockSpec((HPAD, HPAD), lambda i: (0, 0)),          # W2 resident
                pl.BlockSpec((1, HPAD), lambda i: (0, 0)),             # b2 resident
                pl.BlockSpec((HPAD, n_actions), lambda i: (0, 0)),     # W3 resident
                pl.BlockSpec((1, n_actions), lambda i: (0, 0)),        # b3 resident
            ],
            out_specs=pl.BlockSpec((tb, n_actions), lambda i: (i, 0)),  # narrow out
        ),
        compiler_params=pltpu.CompilerParams(
            dimension_semantics=("parallel",),   # shard batch grid across TCs (v7x)
            vmem_limit_bytes=32 * 1024 * 1024,   # covers tb<=4096 on all generations
        ),
    )(x2, w1p, b1p, w2p, b2p, w3p, b3p)

    # Row-only slice (drop batch padding); fused into the enclosing jit.
    return q[:B]


@jax.jit
def qfunction_forward(x, padded_params):
    """Module forward: returns the Q-value tensor (DiscreteActionValue payload)."""
    return _forward_impl(x, padded_params)


@jax.jit
def qfunction_forward_and_act(x, padded_params):
    """Forward + DiscreteActionValue greedy-action bookkeeping in ONE jit/dispatch."""
    q = _forward_impl(x, padded_params)
    return q, jnp.argmax(q, axis=-1)


# ------------------------------- init / reference ----------------------------


def init_params(key, obs_size, n_actions, hidden=HIDDEN):
    """Deterministic synthetic init (PyTorch-Linear-like uniform ranges),
    stored as (in_features, out_features) so forward is x @ W + b."""
    ks = jax.random.split(key, 6)

    def linear(kw, kb, fan_in, fan_out):
        bound = 1.0 / jnp.sqrt(jnp.float32(fan_in))
        w = jax.random.uniform(kw, (fan_in, fan_out), jnp.float32, -bound, bound)
        b = jax.random.uniform(kb, (1, fan_out), jnp.float32, -bound, bound)
        return w, b

    w1, b1 = linear(ks[0], ks[1], obs_size, hidden)
    w2, b2 = linear(ks[2], ks[3], hidden, hidden)
    w3, b3 = linear(ks[4], ks[5], hidden, n_actions)
    return (w1, b1, w2, b2, w3, b3)


def reference_forward_f32(x, params):
    """Pure-JAX full-precision reference (module semantics)."""
    w1, b1, w2, b2, w3, b3 = params
    h = x.reshape(x.shape[0], -1).astype(jnp.float32)
    h = jnp.maximum(h @ w1 + b1, 0.0)
    h = jnp.maximum(h @ w2 + b2, 0.0)
    return h @ w3 + b3


def reference_forward_mixed(x, params, use_bf16=USE_BF16):
    """Pure-JAX reference matching the kernel's bf16-operand / f32-accumulate math."""
    w1, b1, w2, b2, w3, b3 = params
    wdt = jnp.bfloat16 if use_bf16 else jnp.float32
    h = x.reshape(x.shape[0], -1).astype(wdt)
    h = jnp.dot(h, w1.astype(wdt), preferred_element_type=jnp.float32) + b1
    h = jnp.maximum(h, 0.0).astype(wdt)
    h = jnp.dot(h, w2.astype(wdt), preferred_element_type=jnp.float32) + b2
    h = jnp.maximum(h, 0.0).astype(wdt)
    return jnp.dot(h, w3.astype(wdt), preferred_element_type=jnp.float32) + b3


# ---------------------------------- main --------------------------------------


if __name__ == "__main__":
    # Small shapes consistent with the module: obs is an (H, W) grid per batch item.
    B, H, W = 2, 4, 4          # obs_size = 16
    n_actions = 4

    key = jax.random.PRNGKey(0)
    k_x, k_p, k_x2 = jax.random.split(key, 3)
    x = jax.random.normal(k_x, (B, H, W), dtype=jnp.float32)

    params = init_params(k_p, H * W, n_actions)
    padded_params = prepare_params(params, H * W, n_actions)

    # Fused forward + greedy-action (DiscreteActionValue bookkeeping) in one dispatch.
    q, greedy_actions = qfunction_forward_and_act(x, padded_params)
    q = jax.block_until_ready(q)
    greedy_actions = jax.block_until_ready(greedy_actions)
    assert q.shape == (B, n_actions)
    assert greedy_actions.shape == (B,)

    # Tight check vs a reference using the SAME mixed-precision math as the kernel.
    q_mixed = reference_forward_mixed(x, params)
    assert jnp.allclose(q, q_mixed, atol=1e-2, rtol=1e-2), "mismatch vs mixed-precision reference"

    # Loose check vs the full-f32 module semantics (bf16 operand rounding only).
    q_f32 = reference_forward_f32(x, params)
    assert jnp.allclose(q, q_f32, atol=1e-1, rtol=1e-1), "mismatch vs f32 reference"

    # Exercise the multi-step / ragged batch-tiling path (2 grid steps, tail padding).
    xb = jax.random.normal(k_x2, (600, H, W), dtype=jnp.float32)
    qb = jax.block_until_ready(qfunction_forward(xb, padded_params))
    assert qb.shape == (600, n_actions)
    qb_mixed = reference_forward_mixed(xb, params)
    assert jnp.allclose(qb, qb_mixed, atol=1e-2, rtol=1e-2), "mismatch on multi-tile batch"

    print("KERNEL_OK")
</pallas_src>

<mosaic_0001>
module attributes {stable_mosaic.version = 11 : i64} {
  func.func @qfunction_kernel(%arg0: i32, %arg1: memref<8x16xf32, #tpu.memory_space<vmem>>, %arg2: memref<16x128xbf16, #tpu.memory_space<vmem>>, %arg3: memref<1x128xf32, #tpu.memory_space<vmem>>, %arg4: memref<128x128xbf16, #tpu.memory_space<vmem>>, %arg5: memref<1x128xf32, #tpu.memory_space<vmem>>, %arg6: memref<128x4xbf16, #tpu.memory_space<vmem>>, %arg7: memref<1x4xf32, #tpu.memory_space<vmem>>, %arg8: memref<8x4xf32, #tpu.memory_space<vmem>>) attributes {dimension_semantics = [#tpu.dimension_semantics<parallel>], iteration_bounds = array<i64: 1>, scalar_prefetch = 0 : i64, scratch_operands = 0 : i64, tpu.core_type = #tpu.core_type<tc>, window_params = [{transform_indices = @transform_0, window_bounds = array<i64: 8, 16>}, {pipeline_mode = #tpu.pipeline_mode<synchronous>, transform_indices = @transform_1, window_bounds = array<i64: 16, 128>}, {pipeline_mode = #tpu.pipeline_mode<synchronous>, transform_indices = @transform_2, window_bounds = array<i64: 1, 128>}, {pipeline_mode = #tpu.pipeline_mode<synchronous>, transform_indices = @transform_3, window_bounds = array<i64: 128, 128>}, {pipeline_mode = #tpu.pipeline_mode<synchronous>, transform_indices = @transform_4, window_bounds = array<i64: 1, 128>}, {pipeline_mode = #tpu.pipeline_mode<synchronous>, transform_indices = @transform_5, window_bounds = array<i64: 128, 4>}, {pipeline_mode = #tpu.pipeline_mode<synchronous>, transform_indices = @transform_6, window_bounds = array<i64: 1, 4>}, {transform_indices = @transform_7, window_bounds = array<i64: 8, 4>}]} {
    %c0 = arith.constant 0 : index
    %c0_0 = arith.constant 0 : index
    %0 = vector.load %arg1[%c0, %c0_0] : memref<8x16xf32, #tpu.memory_space<vmem>>, vector<8x16xf32>
    %1 = arith.truncf %0 : vector<8x16xf32> to vector<8x16xbf16>
    %c0_1 = arith.constant 0 : index
    %c0_2 = arith.constant 0 : index
    %2 = vector.load %arg2[%c0_1, %c0_2] : memref<16x128xbf16, #tpu.memory_space<vmem>>, vector<16x128xbf16>
    %cst = arith.constant dense<0.000000e+00> : vector<8x128xf32>
    %3 = tpu.matmul %1, %2, %cst {dimension_numbers = #tpu.dot_dimension_numbers<[1], [0], [0], [1], [0, 0, 1, 1], [], []>} : vector<8x16xbf16>, vector<16x128xbf16>, vector<8x128xf32> -> vector<8x128xf32>
    %c0_3 = arith.constant 0 : index
    %c0_4 = arith.constant 0 : index
    %4 = vector.load %arg3[%c0_3, %c0_4] : memref<1x128xf32, #tpu.memory_space<vmem>>, vector<1x128xf32>
    %5 = vector.broadcast %4 : vector<1x128xf32> to vector<8x128xf32>
    %6 = arith.addf %3, %5 : vector<8x128xf32>
    %cst_5 = arith.constant 0.000000e+00 : f32
    %7 = vector.broadcast %cst_5 : f32 to vector<8x128xf32>
    %8 = arith.maximumf %6, %7 : vector<8x128xf32>
    %9 = arith.truncf %8 : vector<8x128xf32> to vector<8x128xbf16>
    %c0_6 = arith.constant 0 : index
    %c0_7 = arith.constant 0 : index
    %10 = vector.load %arg4[%c0_6, %c0_7] : memref<128x128xbf16, #tpu.memory_space<vmem>>, vector<128x128xbf16>
    %cst_8 = arith.constant dense<0.000000e+00> : vector<8x128xf32>
    %11 = tpu.matmul %9, %10, %cst_8 {dimension_numbers = #tpu.dot_dimension_numbers<[1], [0], [0], [1], [0, 0, 1, 1], [], []>} : vector<8x128xbf16>, vector<128x128xbf16>, vector<8x128xf32> -> vector<8x128xf32>
    %c0_9 = arith.constant 0 : index
    %c0_10 = arith.constant 0 : index
    %12 = vector.load %arg5[%c0_9, %c0_10] : memref<1x128xf32, #tpu.memory_space<vmem>>, vector<1x128xf32>
    %13 = vector.broadcast %12 : vector<1x128xf32> to vector<8x128xf32>
    %14 = arith.addf %11, %13 : vector<8x128xf32>
    %cst_11 = arith.constant 0.000000e+00 : f32
    %15 = vector.broadcast %cst_11 : f32 to vector<8x128xf32>
    %16 = arith.maximumf %14, %15 : vector<8x128xf32>
    %17 = arith.truncf %16 : vector<8x128xf32> to vector<8x128xbf16>
    %c0_12 = arith.constant 0 : index
    %c0_13 = arith.constant 0 : index
    %18 = vector.load %arg6[%c0_12, %c0_13] : memref<128x4xbf16, #tpu.memory_space<vmem>>, vector<128x4xbf16>
    %cst_14 = arith.constant dense<0.000000e+00> : vector<8x4xf32>
    %19 = tpu.matmul %17, %18, %cst_14 {dimension_numbers = #tpu.dot_dimension_numbers<[1], [0], [0], [1], [0, 0, 1, 1], [], []>} : vector<8x128xbf16>, vector<128x4xbf16>, vector<8x4xf32> -> vector<8x4xf32>
    %c0_15 = arith.constant 0 : index
    %c0_16 = arith.constant 0 : index
    %20 = vector.load %arg7[%c0_15, %c0_16] : memref<1x4xf32, #tpu.memory_space<vmem>>, vector<1x4xf32>
    %21 = vector.broadcast %20 : vector<1x4xf32> to vector<8x4xf32>
    %22 = arith.addf %19, %21 : vector<8x4xf32>
    %c0_17 = arith.constant 0 : index
    %c0_18 = arith.constant 0 : index
    %23 = vector.load %arg8[%c0_17, %c0_18] : memref<8x4xf32, #tpu.memory_space<vmem>>, vector<8x4xf32>
    tpu.vector_store %arg8[%c0_17, %c0_18], %22 {strides = array<i32>} : memref<8x4xf32, #tpu.memory_space<vmem>>, vector<8x4xf32>,
    return
  }
  func.func @transform_0(%arg0: i32) -> (i32, i32) {
    %c0_i32 = arith.constant 0 : i32
    %c0_i32_0 = arith.constant 0 : i32
    return %arg0, %c0_i32 : i32, i32
  }
  func.func @transform_1(%arg0: i32) -> (i32, i32) {
    %c0_i32 = arith.constant 0 : i32
    %c0_i32_0 = arith.constant 0 : i32
    %c0_i32_1 = arith.constant 0 : i32
    return %c0_i32, %c0_i32_0 : i32, i32
  }
  func.func @transform_2(%arg0: i32) -> (i32, i32) {
    %c0_i32 = arith.constant 0 : i32
    %c0_i32_0 = arith.constant 0 : i32
    %c0_i32_1 = arith.constant 0 : i32
    return %c0_i32, %c0_i32_0 : i32, i32
  }
  func.func @transform_3(%arg0: i32) -> (i32, i32) {
    %c0_i32 = arith.constant 0 : i32
    %c0_i32_0 = arith.constant 0 : i32
    %c0_i32_1 = arith.constant 0 : i32
    return %c0_i32, %c0_i32_0 : i32, i32
  }
  func.func @transform_4(%arg0: i32) -> (i32, i32) {
    %c0_i32 = arith.constant 0 : i32
    %c0_i32_0 = arith.constant 0 : i32
    %c0_i32_1 = arith.constant 0 : i32
    return %c0_i32, %c0_i32_0 : i32, i32
  }
  func.func @transform_5(%arg0: i32) -> (i32, i32) {
    %c0_i32 = arith.constant 0 : i32
    %c0_i32_0 = arith.constant 0 : i32
    %c0_i32_1 = arith.constant 0 : i32
    return %c0_i32, %c0_i32_0 : i32, i32
  }
  func.func @transform_6(%arg0: i32) -> (i32, i32) {
    %c0_i32 = arith.constant 0 : i32
    %c0_i32_0 = arith.constant 0 : i32
    %c0_i32_1 = arith.constant 0 : i32
    return %c0_i32, %c0_i32_0 : i32, i32
  }
  func.func @transform_7(%arg0: i32) -> (i32, i32) {
    %c0_i32 = arith.constant 0 : i32
    %c0_i32_0 = arith.constant 0 : i32
    return %arg0, %c0_i32 : i32, i32
  }
}

</mosaic_0001>

<llo_original>
// kernel: qfunction_forward_and_act.1
$region0: #{qfunction_forward_and_act.1}
  #allocation0 [shape = 'u32[]', space=smem, size = 0x4, offset = 0x4, fixed_abs, tag = 'smem constant byte address 0x4 - core index']
  #allocation1 [shape = 'u32[144,128]{1,0:T(1,128)}', space=vmem, size = 0x12000, scoped, tag = 'internal scratch']
  %s0 = inlined_call_operand.vmem [shape: f32[8,16], index: 0, kind: input, shape index: {}]
  %s1 = inlined_call_operand.vmem [shape: bf16[16,128], index: 1, kind: input, shape index: {}]
  %s2 = inlined_call_operand.vmem [shape: f32[1,128], index: 2, kind: input, shape index: {}]
  %s3 = inlined_call_operand.vmem [shape: bf16[128,128], index: 3, kind: input, shape index: {}]
  %s4 = inlined_call_operand.vmem [shape: f32[1,128], index: 4, kind: input, shape index: {}]
  %s5 = inlined_call_operand.vmem [shape: bf16[128,4], index: 5, kind: input, shape index: {}]
  %s6 = inlined_call_operand.vmem [shape: f32[1,4], index: 6, kind: input, shape index: {}]
  %s7 = inlined_call_operand.vmem [shape: f32[8,4], index: 7, kind: output, shape index: {}]
  %s8 = sld [smem:[#allocation0]]
  $region38: #{qfunction_forward_and_act.1} parent=0
    _
  %s10 = ssub.s32 1, %s8
  %s11 = scalar_select 0, %s10, %s8
  // Predicated region
  $region2: #{qfunction_forward_and_act.1} parent=0 // pred_check
    _
  $region3: #{qfunction_forward_and_act.1} parent=0 // pred_check_branch
    %13 = sbr.rel (0) target = $region5
  $region4: #{qfunction_forward_and_act.1} parent=0 // pred_region
    _
  $region5: #{qfunction_forward_and_act.1} parent=0 // pred_fallthru
    _
  // Predicated region
  $region6: #{qfunction_forward_and_act.1} parent=0 // pred_check
    _
  $region7: #{qfunction_forward_and_act.1} parent=0 // pred_check_branch
    %15 = sbr.rel (0) target = $region9
  $region8: #{qfunction_forward_and_act.1} parent=0 // pred_region
    _
  $region9: #{qfunction_forward_and_act.1} parent=0 // pred_fallthru
    _
  // Predicated region
  $region10: #{qfunction_forward_and_act.1} parent=0 // pred_check
    _
  $region11: #{qfunction_forward_and_act.1} parent=0 // pred_check_branch
    %17 = sbr.rel (0) target = $region13
  $region12: #{qfunction_forward_and_act.1} parent=0 // pred_region
    _
  $region13: #{qfunction_forward_and_act.1} parent=0 // pred_fallthru
    _
  // Predicated region
  $region14: #{qfunction_forward_and_act.1} parent=0 // pred_check
    _
  $region15: #{qfunction_forward_and_act.1} parent=0 // pred_check_branch
    %19 = sbr.rel (0) target = $region17
  $region16: #{qfunction_forward_and_act.1} parent=0 // pred_region
    _
  $region17: #{qfunction_forward_and_act.1} parent=0 // pred_fallthru
    _
  // Predicated region
  $region18: #{qfunction_forward_and_act.1} parent=0 // pred_check
    _
  $region19: #{qfunction_forward_and_act.1} parent=0 // pred_check_branch
    %21 = sbr.rel (0) target = $region21
  $region20: #{qfunction_forward_and_act.1} parent=0 // pred_region
    _
  $region21: #{qfunction_forward_and_act.1} parent=0 // pred_fallthru
    _
  // Predicated region
  $region22: #{qfunction_forward_and_act.1} parent=0 // pred_check
    _
  $region23: #{qfunction_forward_and_act.1} parent=0 // pred_check_branch
    %23 = sbr.rel (0) target = $region25
  $region24: #{qfunction_forward_and_act.1} parent=0 // pred_region
    _
  $region25: #{qfunction_forward_and_act.1} parent=0 // pred_fallthru
    _
  // Predicated region
  $region26: #{qfunction_forward_and_act.1} parent=0 // pred_check
    _
  $region27: #{qfunction_forward_and_act.1} parent=0 // pred_check_branch
    %25 = sbr.rel (0) target = $region29
  $region28: #{qfunction_forward_and_act.1} parent=0 // pred_region
    _
  $region29: #{qfunction_forward_and_act.1} parent=0 // pred_fallthru
    _
  %v27 = vld [vmem:[%s0] sm:$0xff]
  %v28 = vpack.c.bf16 %v27, %v27
  %v29 = vld [vmem:[%s1] sm:$0xf]
  %v30 = vld [vmem:[%s1 + $0x4] sm:$0xf]
  %v31 = vld [vmem:[%s2] sm:$0x1]
  %v33 = vlaneseq
  %v34 = vshrl.u32 %v33, 7
  %v35 = vsub.s32 0, %v34
  %v36 = vrot.slane %v31, %v35
  %v40 = vunpack.c.l.b16 %v29
  %v41 = vunpack.c.l.b16 %v30
  %v42 = vpack.c.b16 %v41, %v40
  %vm44 = vcmask 130048
  %v46 = vsel %vm44, %v28, 0
  %48 = vmatprep.subr.bf16.mxu0 0
  %49 = vmatpush1.bf16.msra.mxu0 0
  %50 = vmatprep.subr.bf16.mxu0 0
  %51 = vmatpush1.bf16.msra.mxu0 0
  %52 = vmatprep.subr.bf16.mxu0 0
  %53 = vmatpush1.bf16.msra.mxu0 0
  %54 = vmatprep.subr.bf16.mxu0 0
  %55 = vmatpush1.bf16.msra.mxu0 0
  %56 = vmatprep.subr.bf16.mxu0 0
  %57 = vmatpush1.bf16.msra.mxu0 0
  %58 = vmatprep.subr.bf16.mxu0 0
  %59 = vmatpush1.bf16.msra.mxu0 0
  %60 = vmatprep.subr.bf16.mxu0 0
  %61 = vmatpush1.bf16.msra.mxu0 0
  %62 = vmatprep.subr.bf16.mxu0 0
  %63 = vmatpush1.bf16.msra.mxu0 %v42
  %64 = vmatprep.subr.bf16.mxu0 0
  %65 = vmatpush2.bf16.msra.mxu0 0
  %66 = vmatprep.subr.bf16.mxu0 0
  %67 = vmatpush2.bf16.msra.mxu0 0
  %68 = vmatprep.subr.bf16.mxu0 0
  %69 = vmatpush2.bf16.msra.mxu0 0
  %70 = vmatprep.subr.bf16.mxu0 0
  %71 = vmatpush2.bf16.msra.mxu0 0
  %72 = vmatprep.subr.bf16.mxu0 0
  %73 = vmatpush2.bf16.msra.mxu0 0
  %74 = vmatprep.subr.bf16.mxu0 0
  %75 = vmatpush2.bf16.msra.mxu0 0
  %76 = vmatprep.subr.bf16.mxu0 0
  %77 = vmatpush2.bf16.msra.mxu0 0
  %78 = vmatprep.subr.bf16.mxu0 0
  %79 = vmatpush2.bf16.msra.mxu0 0
  %80 = vmatprep.mubr.bf16.mxu0 0
  %81 = vmatmul.mubr.bf16.gmra.mxu0 %v46
  %v82 = vpop.f32.mrf.mxu0
  %v83 = vadd.f32 %v36, %v82
  %v84 = vpop.f32.mrf.mxu0
  %v85 = vpop.f32.mrf.mxu0
  %v86 = vpop.f32.mrf.mxu0
  %87 = vdwg.mxu0
  %v88 = vmax.f32 %v83, 0.0
  %v89 = vpack.c.bf16 %v88, %v88
  %v90 = vld [vmem:[%s3] sm:$0xf]
  %v91 = vld [vmem:[%s3 + $0x4] sm:$0xf]
  %v92 = vld [vmem:[%s3 + $0x8] sm:$0xf]
  %v93 = vld [vmem:[%s3 + $0xc] sm:$0xf]
  %v94 = vld [vmem:[%s3 + $0x10] sm:$0xf]
  %v95 = vld [vmem:[%s3 + $0x14] sm:$0xf]
  %v96 = vld [vmem:[%s3 + $0x18] sm:$0xf]
  %v97 = vld [vmem:[%s3 + $0x1c] sm:$0xf]
  %v98 = vld [vmem:[%s3 + $0x20] sm:$0xf]
  %v99 = vld [vmem:[%s3 + $0x24] sm:$0xf]
  %v100 = vld [vmem:[%s3 + $0x28] sm:$0xf]
  %v101 = vld [vmem:[%s3 + $0x2c] sm:$0xf]
  %v102 = vld [vmem:[%s3 + $0x30] sm:$0xf]
  %v103 = vld [vmem:[%s3 + $0x34] sm:$0xf]
  %v104 = vld [vmem:[%s3 + $0x38] sm:$0xf]
  %v105 = vld [vmem:[%s3 + $0x3c] sm:$0xf]
  %v106 = vld [vmem:[%s4] sm:$0x1]
  %v108 = vlaneseq
  %v109 = vshrl.u32 %v108, 7
  %v110 = vsub.s32 0, %v109
  %v111 = vrot.slane %v106, %v110
  %v129 = vunpack.c.l.b16 %v90
  %v130 = vunpack.c.l.b16 %v91
  %v131 = vunpack.c.l.b16 %v92
  %v132 = vunpack.c.l.b16 %v93
  %v133 = vunpack.c.l.b16 %v94
  %v134 = vunpack.c.l.b16 %v95
  %v135 = vunpack.c.l.b16 %v96
  %v136 = vunpack.c.l.b16 %v97
  %v137 = vunpack.c.l.b16 %v98
  %v138 = vunpack.c.l.b16 %v99
  %v139 = vunpack.c.l.b16 %v100
  %v140 = vunpack.c.l.b16 %v101
  %v141 = vunpack.c.l.b16 %v102
  %v142 = vunpack.c.l.b16 %v103
  %v143 = vunpack.c.l.b16 %v104
  %v144 = vunpack.c.l.b16 %v105
  %v145 = vpack.c.b16 %v130, %v129
  %v146 = vpack.c.b16 %v132, %v131
  %v147 = vpack.c.b16 %v134, %v133
  %v148 = vpack.c.b16 %v136, %v135
  %v149 = vpack.c.b16 %v138, %v137
  %v150 = vpack.c.b16 %v140, %v139
  %v151 = vpack.c.b16 %v142, %v141
  %v152 = vpack.c.b16 %v144, %v143
  %161 = vmatprep.subr.bf16.mxu0 0
  %162 = vmatpush1.bf16.msra.mxu0 %v152
  %163 = vmatprep.subr.bf16.mxu0 0
  %164 = vmatpush1.bf16.msra.mxu0 %v151
  %165 = vmatprep.subr.bf16.mxu0 0
  %166 = vmatpush1.bf16.msra.mxu0 %v150
  %167 = vmatprep.subr.bf16.mxu0 0
  %168 = vmatpush1.bf16.msra.mxu0 %v149
  %169 = vmatprep.subr.bf16.mxu0 0
  %170 = vmatpush1.bf16.msra.mxu0 %v148
  %171 = vmatprep.subr.bf16.mxu0 0
  %172 = vmatpush1.bf16.msra.mxu0 %v147
  %173 = vmatprep.subr.bf16.mxu0 0
  %174 = vmatpush1.bf16.msra.mxu0 %v146
  %175 = vmatprep.subr.bf16.mxu0 0
  %176 = vmatpush1.bf16.msra.mxu0 %v145
  %177 = vmatprep.subr.bf16.mxu0 0
  %178 = vmatpush2.bf16.msra.mxu0 0
  %179 = vmatprep.subr.bf16.mxu0 0
  %180 = vmatpush2.bf16.msra.mxu0 0
  %181 = vmatprep.subr.bf16.mxu0 0
  %182 = vmatpush2.bf16.msra.mxu0 0
  %183 = vmatprep.subr.bf16.mxu0 0
  %184 = vmatpush2.bf16.msra.mxu0 0
  %185 = vmatprep.subr.bf16.mxu0 0
  %186 = vmatpush2.bf16.msra.mxu0 0
  %187 = vmatprep.subr.bf16.mxu0 0
  %188 = vmatpush2.bf16.msra.mxu0 0
  %189 = vmatprep.subr.bf16.mxu0 0
  %190 = vmatpush2.bf16.msra.mxu0 0
  %191 = vmatprep.subr.bf16.mxu0 0
  %192 = vmatpush2.bf16.msra.mxu0 0
  %193 = vmatprep.mubr.bf16.mxu0 0
  %194 = vmatmul.mubr.bf16.gmra.mxu0 %v89
  %v195 = vpop.f32.mrf.mxu0
  %v196 = vadd.f32 %v111, %v195
  %v197 = vpop.f32.mrf.mxu0
  %v198 = vpop.f32.mrf.mxu0
  %v199 = vpop.f32.mrf.mxu0
  %200 = vdwg.mxu0
  %v201 = vmax.f32 %v196, 0.0
  %v202 = vpack.c.bf16 %v201, %v201
  %v203 = vld [vmem:[%s5] sm:$0xf]
  %v204 = vld [vmem:[%s5 + $0x4] sm:$0xf]
  %v205 = vld [vmem:[%s5 + $0x8] sm:$0xf]
  %v206 = vld [vmem:[%s5 + $0xc] sm:$0xf]
  %v207 = vld [vmem:[%s5 + $0x10] sm:$0xf]
  %v208 = vld [vmem:[%s5 + $0x14] sm:$0xf]
  %v209 = vld [vmem:[%s5 + $0x18] sm:$0xf]
  %v210 = vld [vmem:[%s5 + $0x1c] sm:$0xf]
  %v211 = vld [vmem:[%s5 + $0x20] sm:$0xf]
  %v212 = vld [vmem:[%s5 + $0x24] sm:$0xf]
  %v213 = vld [vmem:[%s5 + $0x28] sm:$0xf]
  %v214 = vld [vmem:[%s5 + $0x2c] sm:$0xf]
  %v215 = vld [vmem:[%s5 + $0x30] sm:$0xf]
  %v216 = vld [vmem:[%s5 + $0x34] sm:$0xf]
  %v217 = vld [vmem:[%s5 + $0x38] sm:$0xf]
  %v218 = vld [vmem:[%s5 + $0x3c] sm:$0xf]
  %v219 = vld [vmem:[%s6] sm:$0x1]
  %v221 = vlaneseq
  %v222 = vshrl.u32 %v221, 7
  %v223 = vsub.s32 0, %v222
  %v224 = vrot.slane %v219, %v223
  %v242 = vunpack.c.l.b16 %v203
  %v243 = vunpack.c.l.b16 %v204
  %v244 = vunpack.c.l.b16 %v205
  %v245 = vunpack.c.l.b16 %v206
  %v246 = vunpack.c.l.b16 %v207
  %v247 = vunpack.c.l.b16 %v208
  %v248 = vunpack.c.l.b16 %v209
  %v249 = vunpack.c.l.b16 %v210
  %v250 = vunpack.c.l.b16 %v211
  %v251 = vunpack.c.l.b16 %v212
  %v252 = vunpack.c.l.b16 %v213
  %v253 = vunpack.c.l.b16 %v214
  %v254 = vunpack.c.l.b16 %v215
  %v255 = vunpack.c.l.b16 %v216
  %v256 = vunpack.c.l.b16 %v217
  %v257 = vunpack.c.l.b16 %v218
  %v258 = vpack.c.b16 %v243, %v242
  %v259 = vpack.c.b16 %v245, %v244
  %v260 = vpack.c.b16 %v247, %v246
  %v261 = vpack.c.b16 %v249, %v248
  %v262 = vpack.c.b16 %v251, %v250
  %v263 = vpack.c.b16 %v253, %v252
  %v264 = vpack.c.b16 %v255, %v254
  %v265 = vpack.c.b16 %v257, %v256
  %274 = vmatprep.subr.bf16.mxu0 0
  %275 = vmatpush1.bf16.msra.mxu0 %v265
  %276 = vmatprep.subr.bf16.mxu0 0
  %277 = vmatpush1.bf16.msra.mxu0 %v264
  %278 = vmatprep.subr.bf16.mxu0 0
  %279 = vmatpush1.bf16.msra.mxu0 %v263
  %280 = vmatprep.subr.bf16.mxu0 0
  %281 = vmatpush1.bf16.msra.mxu0 %v262
  %282 = vmatprep.subr.bf16.mxu0 0
  %283 = vmatpush1.bf16.msra.mxu0 %v261
  %284 = vmatprep.subr.bf16.mxu0 0
  %285 = vmatpush1.bf16.msra.mxu0 %v260
  %286 = vmatprep.subr.bf16.mxu0 0
  %287 = vmatpush1.bf16.msra.mxu0 %v259
  %288 = vmatprep.subr.bf16.mxu0 0
  %289 = vmatpush1.bf16.msra.mxu0 %v258
  %290 = vmatprep.subr.bf16.mxu0 0
  %291 = vmatpush2.bf16.msra.mxu0 0
  %292 = vmatprep.subr.bf16.mxu0 0
  %293 = vmatpush2.bf16.msra.mxu0 0
  %294 = vmatprep.subr.bf16.mxu0 0
  %295 = vmatpush2.bf16.msra.mxu0 0
  %296 = vmatprep.subr.bf16.mxu0 0
  %297 = vmatpush2.bf16.msra.mxu0 0
  %298 = vmatprep.subr.bf16.mxu0 0
  %299 = vmatpush2.bf16.msra.mxu0 0
  %300 = vmatprep.subr.bf16.mxu0 0
  %301 = vmatpush2.bf16.msra.mxu0 0
  %302 = vmatprep.subr.bf16.mxu0 0
  %303 = vmatpush2.bf16.msra.mxu0 0
  %304 = vmatprep.subr.bf16.mxu0 0
  %305 = vmatpush2.bf16.msra.mxu0 0
  %306 = vmatprep.mubr.bf16.mxu0 0
  %307 = vmatmul.mubr.bf16.gmra.mxu0 %v202
  %v308 = vpop.f32.mrf.mxu0
  %v309 = vadd.f32 %v224, %v308
  %v310 = vpop.f32.mrf.mxu0
  %v311 = vpop.f32.mrf.mxu0
  %v312 = vpop.f32.mrf.mxu0
  %313 = vdwg.mxu0
  %vm314 = vcmask 31744
  %315 = vst.msk [vmem:[%s7] sm:$0xff] %vm314, %v309
  // Predicated region
  $region30: #{qfunction_forward_and_act.1} parent=0 // pred_check
    _
  $region31: #{qfunction_forward_and_act.1} parent=0 // pred_check_branch
    %317 = sbr.rel (0) target = $region33
  $region32: #{qfunction_forward_and_act.1} parent=0 // pred_region
    _
  $region33: #{qfunction_forward_and_act.1} parent=0 // pred_fallthru
    _
  // Predicated region
  $region34: #{qfunction_forward_and_act.1} parent=0 // pred_check
    _
  $region35: #{qfunction_forward_and_act.1} parent=0 // pred_check_branch
    %319 = sbr.rel (0) target = $region37
  $region36: #{qfunction_forward_and_act.1} parent=0 // pred_region
    _
  $region37: #{qfunction_forward_and_act.1} parent=0 // pred_fallthru
    _

</llo_original>
